<compile_context>
chip_gen: v7x
topology: tpu7x:2x2x1
jax: 0.10.0
libtpu: 0.0.40
codegen_flags: <defaults>
</compile_context>

<pallas_src>
import numpy as np

import jax
import jax.numpy as jnp
from jax import lax
from jax.experimental import pallas as pl
from jax.experimental.pallas import tpu as pltpu


COMPUTE_DTYPE = jnp.bfloat16   # MXU operand dtype; accumulation / bias / epilogue stay f32
_LANE = 128
_TARGET_M = 256                # target matmul M rows per grid step (v6e/v7x MXU height)


def _round_up(x, m):
    return -(-x // m) * m


# ------------------------- host-side weight expansion ----------------------- #

def _build_expanded_weight(w_oihw, width_in, k_per_tap, n_pad_to=_LANE):
    """(Cout, Cin, KH, KW) torch conv weight -> (KH*k_per_tap, n_pad) Toeplitz block matrix.

    Row index  = di*k_per_tap + (j+dj)*cin + ci
    Col index  = j*cout + co                       (zero-padded up to n_pad)
    so that  out_row[i, :] = concat_di( x2d[i+di, :] ) @ big
    implements the valid cross-correlation along W for every output column j at once, where
    x2d is the NHWC image flattened to (H, width_in*cin) rows (features per row <= k_per_tap).
    """
    cout, cin, kh, kw = w_oihw.shape
    width_out = width_in - kw + 1
    n0 = width_out * cout
    n_pad = _round_up(n0, n_pad_to)
    assert k_per_tap >= width_in * cin
    wt = np.transpose(np.asarray(w_oihw, np.float32), (2, 3, 1, 0))   # (kh, kw, cin, cout)
    big = np.zeros((kh, k_per_tap, n_pad), np.float32)
    for dj in range(kw):
        for j in range(width_out):
            big[:, (j + dj) * cin:(j + dj + 1) * cin,
                   j * cout:(j + 1) * cout] = wt[:, dj]
    return big.reshape(kh * k_per_tap, n_pad), width_out, n0, n_pad


def _pick_batch_tile(n, h_img, target_m=_TARGET_M):
    """Images per grid step so that M = B_tile*H approaches the MXU height (feedback item 1)."""
    bt = max(1, -(-target_m // h_img))
    bt = min(bt, n)
    # x block second-to-last dim (= bt*h_img) must be a multiple of 8 unless it spans the
    # whole (padded) batch.
    while bt < n and (bt * h_img) % 8 != 0:
        bt += 1
    return bt


def _vmem_capacity_bytes():
    try:
        info = pltpu.get_tpu_info()
        cap = getattr(info, "vmem_capacity_bytes", None)
        if cap:
            return int(cap)
    except Exception:
        pass
    return 64 << 20   # conservative fallback (v7x physical per-TC VMEM)


# ------------------------------ Pallas kernel ------------------------------- #

def _fused_two_layer_conv_kernel(x_ref, w1_ref, b1_ref, w2_ref, b2_ref, pre_ref):
    """Fused conv+ReLU+conv for one batch-tile (one grid step).

    x_ref   : (B_tile*H, W*Cin)    f32   NHWC rows of B_tile images stacked along sublanes
    w1_ref  : (KH1*W*Cin, N1)      bf16  K-collapsed Toeplitz weights (N1 = 128-padded W1*Ch)
    b1_ref  : (1, N1)              f32
    w2_ref  : (KH2*N1, N2)         bf16  (N2 = 128-padded W2*Cout)
    b2_ref  : (1, N2)              f32
    pre_ref : (1, B_tile, H2, N2)  f32   logits only (sigmoid applied wrapper-side)
    """
    wc = x_ref.shape[1]
    n1 = w1_ref.shape[1]
    kh1 = w1_ref.shape[0] // wc
    kh2 = w2_ref.shape[0] // n1
    rows = x_ref.shape[0]
    b_tile, h2 = pre_ref.shape[1], pre_ref.shape[2]
    h_img = rows // b_tile
    r1 = rows - kh1 + 1          # layer-1 rows (includes cross-image rows, discarded later)
    r2 = r1 - kh2 + 1            # layer-2 rows

    x = x_ref[...]               # (rows, WC) f32 — f32 slices avoid bf16 sublane repack

    # ---- layer 1: single K-collapsed MXU matmul over the whole batch-tile ----
    lhs1 = jnp.concatenate([x[di:di + r1, :] for di in range(kh1)], axis=-1)   # (r1, KH1*WC)
    acc1 = jnp.dot(lhs1.astype(w1_ref.dtype), w1_ref[...],
                   preferred_element_type=jnp.float32)                         # (r1, N1)
    hidden = jnp.maximum(acc1 + b1_ref[...], 0.0)        # f32, never leaves VMEM/vregs

    # ---- layer 2: single K-collapsed MXU matmul + bias ----
    lhs2 = jnp.concatenate([hidden[dj:dj + r2, :] for dj in range(kh2)], axis=-1)  # (r2, KH2*N1)
    acc2 = jnp.dot(lhs2.astype(w2_ref.dtype), w2_ref[...],
                   preferred_element_type=jnp.float32)                         # (r2, N2)
    pre = acc2 + b2_ref[...]

    # ---- scatter the per-image valid row windows to the lane-dense (128-wide) output ----
    for b in range(b_tile):                               # static tiny loop
        pre_ref[0, b, :, :] = pre[b * h_img:b * h_img + h2, :]


def fused_two_layer_conv(x_rows, big1, b1row, big2, b2row, *, b_tile, h_img, h2):
    """x_rows: (N_pad*H, W*Cin) f32.  Returns logits (num_tiles, B_tile, H2, N2) f32."""
    rows_total, wc = x_rows.shape
    n_pad = rows_total // h_img
    num_tiles = n_pad // b_tile
    n1 = big1.shape[1]
    n2 = big2.shape[1]
    kh1 = big1.shape[0] // wc
    kh2 = big2.shape[0] // n1
    r1 = b_tile * h_img - kh1 + 1
    r2 = r1 - kh2 + 1

    out_shape = jax.ShapeDtypeStruct((num_tiles, b_tile, h2, n2), jnp.float32)

    # VMEM budget: double-buffered x tile / output tile, resident (double-buffered) weights,
    # plus in-kernel intermediates (lhs concats, hidden, acc).
    weight_bytes = (big1.size + big2.size) * big1.dtype.itemsize \
                   + (b1row.size + b2row.size) * 4
    x_tile_bytes = b_tile * h_img * wc * 4
    out_tile_bytes = b_tile * h2 * n2 * 4
    interm_bytes = (r1 * (big1.shape[0] * 6 + n1 * 8)
                    + r2 * (big2.shape[0] * 6 + n2 * 8))
    need = 2 * (x_tile_bytes + out_tile_bytes + weight_bytes) + interm_bytes
    cap = int(0.75 * _vmem_capacity_bytes())     # ~48 MiB on v7x, ~96 MiB on v5e/v6e
    vmem_limit = int(min(cap, max(8 << 20, 2 * need)))

    return pl.pallas_call(
        _fused_two_layer_conv_kernel,
        out_shape=out_shape,
        grid=(num_tiles,),
        in_specs=[
            pl.BlockSpec((b_tile * h_img, wc), lambda i: (i, 0)),      # batch-tile row slab
            pl.BlockSpec(big1.shape, lambda i: (0, 0)),                # VMEM-resident weights
            pl.BlockSpec(b1row.shape, lambda i: (0, 0)),
            pl.BlockSpec(big2.shape, lambda i: (0, 0)),
            pl.BlockSpec(b2row.shape, lambda i: (0, 0)),
        ],
        out_specs=pl.BlockSpec((1, b_tile, h2, n2), lambda i: (i, 0, 0, 0)),
        compiler_params=pltpu.CompilerParams(
            dimension_semantics=("parallel",),   # pipelining + megacore over batch tiles
            vmem_limit_bytes=vmem_limit,
        ),
    )(x_rows, big1, b1row, big2, b2row)


# ------------------------------ model wrappers ------------------------------ #

class ForwardLayers:
    """Concrete ForwardLayers: conv3x3(valid) -> ReLU -> conv3x3(valid) -> (sigmoid, logits)."""

    def __init__(self, w1, b1, w2, b2, compute_dtype=COMPUTE_DTYPE):
        # weights given in PyTorch conv layout (Cout, Cin, KH, KW); copied, so the
        # width-keyed parameter cache below cannot go stale.
        self._w1 = np.array(w1, np.float32, copy=True)
        self._b1 = np.array(b1, np.float32, copy=True)
        self._w2 = np.array(w2, np.float32, copy=True)
        self._b2 = np.array(b2, np.float32, copy=True)
        self.ch_hidden, self.cin, self.kh1, self.kw1 = self._w1.shape
        self.cout, _, self.kh2, self.kw2 = self._w2.shape
        # TODO(synk): if logits feed a loss/calibration step, set compute_dtype=jnp.float32 to
        #             avoid compounded bf16 error through both layers.
        self.compute_dtype = compute_dtype
        self._param_cache = {}   # keyed by input spatial width (weights are immutable)

    def _params_for_width(self, width_in):
        if width_in in self._param_cache:
            return self._param_cache[width_in]
        # layer 1: K per tap = W*Cin, output features padded to N1 (multiple of 128)
        big1, w1_out, n1_real, n1 = _build_expanded_weight(
            self._w1, width_in, k_per_tap=width_in * self.cin)
        # layer 2: its input rows are the N1-padded hidden rows -> K per tap = N1
        big2, w2_out, n2_real, n2 = _build_expanded_weight(
            self._w2, w1_out, k_per_tap=n1)
        b1row = np.zeros((1, n1), np.float32)
        b1row[0, :n1_real] = np.tile(self._b1, w1_out)
        b2row = np.zeros((1, n2), np.float32)
        b2row[0, :n2_real] = np.tile(self._b2, w2_out)
        params = (
            jnp.asarray(big1, self.compute_dtype),
            jnp.asarray(b1row, jnp.float32),
            jnp.asarray(big2, self.compute_dtype),
            jnp.asarray(b2row, jnp.float32),
            w1_out, w2_out, n2_real,
        )
        self._param_cache[width_in] = params
        return params

    def __call__(self, x_nchw, **kwargs):
        x = jnp.asarray(x_nchw, jnp.float32)
        n, cin, h_in, w_in = x.shape
        if cin != self.cin:
            raise ValueError(f"ForwardLayers built for Cin={self.cin}, got {cin} channels")

        big1, b1row, big2, b2row, w1_out, w2_out, n2_real = self._params_for_width(w_in)
        h1 = h_in - self.kh1 + 1
        h2 = h1 - self.kh2 + 1

        # Fold batch into the matmul M dimension (feedback item 1).
        b_tile = _pick_batch_tile(n, h_in)
        n_pad = _round_up(n, b_tile)

        # NCHW -> NHWC -> (N, H, W*Cin) rows; pad batch; stack all rows (kept f32 for cheap
        # row-shifted slicing inside the kernel — cast to bf16 at the dot).
        x_nhwc = jnp.transpose(x, (0, 2, 3, 1)).reshape(n, h_in, w_in * cin)
        if n_pad != n:
            x_nhwc = jnp.concatenate(
                [x_nhwc, jnp.zeros((n_pad - n, h_in, w_in * cin), x_nhwc.dtype)], axis=0)
        x_rows = x_nhwc.reshape(n_pad * h_in, w_in * cin)

        pre4 = fused_two_layer_conv(x_rows, big1, b1row, big2, b2row,
                                    b_tile=b_tile, h_img=h_in, h2=h2)

        # strip lane padding / batch padding, back to NCHW
        pre = pre4.reshape(n_pad, h2, big2.shape[1])[:n, :, :n2_real]
        pre_nchw = jnp.transpose(pre.reshape(n, h2, w2_out, self.cout), (0, 3, 1, 2))
        # sigmoid applied here (fuses with the transpose) so the kernel writes logits only
        sig_nchw = jax.nn.sigmoid(pre_nchw)
        return sig_nchw, pre_nchw


class BaseNet:
    """JAX/Pallas port of the PyTorch BaseNet wrapper."""

    def __init__(self, ForwardLayersCls, **kwargs):
        self.forward_net = ForwardLayersCls(**kwargs)

    def forward(self, input, **kwargs):
        net_output, before_sigmoid = self.forward_net(input, **kwargs)
        return (net_output, before_sigmoid)

    def calculate_shape_decreases_3D_Net(self, input_crop_size):
        cropsize_x, cropsize_y, cropsize_z = input_crop_size
        # The spec builds (1, z, x, y); for this 2-D instantiation dim 1 is the channel axis,
        # so cropsize_z must equal Cin.
        # TODO(synk): a genuinely 3-D ForwardLayers would treat z as a spatial (depth) axis.
        if cropsize_z != self.forward_net.cin:
            raise ValueError(
                f"2-D instantiation requires cropsize_z == Cin ({self.forward_net.cin}), "
                f"got {cropsize_z}")
        input_crop = jnp.ones((1, cropsize_z, cropsize_x, cropsize_y), jnp.float32)
        net_output, _ = self.forward_net(input_crop)
        _, outsize_z, outsize_y, outsize_x = net_output.shape
        return (cropsize_x - outsize_x, cropsize_y - outsize_y, cropsize_z - outsize_z)


# ------------------------------ reference impl ------------------------------ #

def _reference_forward(x_nchw, w1, b1, w2, b2):
    dn = ('NCHW', 'OIHW', 'NCHW')
    h = lax.conv_general_dilated(x_nchw, w1, (1, 1), 'VALID', dimension_numbers=dn)
    h = jnp.maximum(h + b1.reshape(1, -1, 1, 1), 0.0)
    pre = lax.conv_general_dilated(h, w2, (1, 1), 'VALID', dimension_numbers=dn)
    pre = pre + b2.reshape(1, -1, 1, 1)
    return jax.nn.sigmoid(pre), pre


# -------------------------------- main -------------------------------------- #

if __name__ == "__main__":
    key = jax.random.PRNGKey(0)
    kx, k1, k2, k3, k4 = jax.random.split(key, 5)

    N, Cin, H, W = 2, 4, 16, 16
    C_hidden, C_out = 8, 1

    x = jax.random.normal(kx, (N, Cin, H, W), jnp.float32)

    # Deterministic synthetic parameters (PyTorch conv layout: Cout, Cin, KH, KW)
    w1 = 0.1 * jax.random.normal(k1, (C_hidden, Cin, 3, 3), jnp.float32)
    b1 = 0.1 * jax.random.normal(k2, (C_hidden,), jnp.float32)
    w2 = 0.1 * jax.random.normal(k3, (C_out, C_hidden, 3, 3), jnp.float32)
    b2 = 0.1 * jax.random.normal(k4, (C_out,), jnp.float32)

    net = BaseNet(ForwardLayers, w1=w1, b1=b1, w2=w2, b2=b2)

    net_output, before_sigmoid = net.forward(x)
    jax.block_until_ready((net_output, before_sigmoid))

    # shapes: two 3x3 valid convs shrink spatial dims by 4
    assert net_output.shape == (N, C_out, H - 4, W - 4)
    assert before_sigmoid.shape == (N, C_out, H - 4, W - 4)

    # correctness vs. pure-JAX f32 reference (tolerance covers bf16 MXU operands)
    ref_sig, ref_pre = _reference_forward(x, w1, b1, w2, b2)
    assert float(jnp.max(jnp.abs(before_sigmoid - ref_pre))) < 5e-2
    assert float(jnp.max(jnp.abs(net_output - ref_sig))) < 5e-2

    # shape-decrease utility (cropsize_z must equal Cin for this 2-D instantiation)
    dec = net.calculate_shape_decreases_3D_Net((16, 16, Cin))
    assert dec[0] == 4 and dec[1] == 4

    print("KERNEL_OK")
</pallas_src>

<mosaic_0001>
module attributes {stable_mosaic.version = 11 : i64} {
  func.func @_fused_two_layer_conv_kernel(%arg0: i32, %arg1: memref<32x64xf32, #tpu.memory_space<vmem>>, %arg2: memref<192x128xbf16, #tpu.memory_space<vmem>>, %arg3: memref<1x128xf32, #tpu.memory_space<vmem>>, %arg4: memref<384x128xbf16, #tpu.memory_space<vmem>>, %arg5: memref<1x128xf32, #tpu.memory_space<vmem>>, %arg6: memref<1x2x12x128xf32, #tpu.memory_space<vmem>>) attributes {dimension_semantics = [#tpu.dimension_semantics<parallel>], iteration_bounds = array<i64: 1>, scalar_prefetch = 0 : i64, scratch_operands = 0 : i64, tpu.core_type = #tpu.core_type<tc>, window_params = [{transform_indices = @transform_0, window_bounds = array<i64: 32, 64>}, {pipeline_mode = #tpu.pipeline_mode<synchronous>, transform_indices = @transform_1, window_bounds = array<i64: 192, 128>}, {pipeline_mode = #tpu.pipeline_mode<synchronous>, transform_indices = @transform_2, window_bounds = array<i64: 1, 128>}, {pipeline_mode = #tpu.pipeline_mode<synchronous>, transform_indices = @transform_3, window_bounds = array<i64: 384, 128>}, {pipeline_mode = #tpu.pipeline_mode<synchronous>, transform_indices = @transform_4, window_bounds = array<i64: 1, 128>}, {transform_indices = @transform_5, window_bounds = array<i64: 1, 2, 12, 128>}]} {
    %c0 = arith.constant 0 : index
    %c0_0 = arith.constant 0 : index
    %0 = vector.load %arg1[%c0, %c0_0] : memref<32x64xf32, #tpu.memory_space<vmem>>, vector<32x64xf32>
    %1 = vector.extract_strided_slice %0 {offsets = [0, 0], sizes = [30, 64], strides = [1, 1]} : vector<32x64xf32> to vector<30x64xf32>
    %2 = vector.extract_strided_slice %0 {offsets = [1, 0], sizes = [30, 64], strides = [1, 1]} : vector<32x64xf32> to vector<30x64xf32>
    %3 = vector.extract_strided_slice %0 {offsets = [2, 0], sizes = [30, 64], strides = [1, 1]} : vector<32x64xf32> to vector<30x64xf32>
    %4 = tpu.concatenate %1, %2, %3 in 1 : vector<30x64xf32>, vector<30x64xf32>, vector<30x64xf32> -> vector<30x192xf32>
    %5 = arith.truncf %4 : vector<30x192xf32> to vector<30x192xbf16>
    %c0_1 = arith.constant 0 : index
    %c0_2 = arith.constant 0 : index
    %6 = vector.load %arg2[%c0_1, %c0_2] : memref<192x128xbf16, #tpu.memory_space<vmem>>, vector<192x128xbf16>
    %cst = arith.constant dense<0.000000e+00> : vector<30x128xf32>
    %7 = tpu.matmul %5, %6, %cst {dimension_numbers = #tpu.dot_dimension_numbers<[1], [0], [0], [1], [0, 0, 1, 1], [], []>} : vector<30x192xbf16>, vector<192x128xbf16>, vector<30x128xf32> -> vector<30x128xf32>
    %c0_3 = arith.constant 0 : index
    %c0_4 = arith.constant 0 : index
    %8 = vector.load %arg3[%c0_3, %c0_4] : memref<1x128xf32, #tpu.memory_space<vmem>>, vector<1x128xf32>
    %9 = vector.broadcast %8 : vector<1x128xf32> to vector<30x128xf32>
    %10 = arith.addf %7, %9 : vector<30x128xf32>
    %cst_5 = arith.constant 0.000000e+00 : f32
    %11 = vector.broadcast %cst_5 : f32 to vector<30x128xf32>
    %12 = arith.maximumf %10, %11 : vector<30x128xf32>
    %13 = vector.extract_strided_slice %12 {offsets = [0, 0], sizes = [28, 128], strides = [1, 1]} : vector<30x128xf32> to vector<28x128xf32>
    %14 = vector.extract_strided_slice %12 {offsets = [1, 0], sizes = [28, 128], strides = [1, 1]} : vector<30x128xf32> to vector<28x128xf32>
    %15 = vector.extract_strided_slice %12 {offsets = [2, 0], sizes = [28, 128], strides = [1, 1]} : vector<30x128xf32> to vector<28x128xf32>
    %16 = tpu.concatenate %13, %14, %15 in 1 : vector<28x128xf32>, vector<28x128xf32>, vector<28x128xf32> -> vector<28x384xf32>
    %17 = arith.truncf %16 : vector<28x384xf32> to vector<28x384xbf16>
    %c0_6 = arith.constant 0 : index
    %c0_7 = arith.constant 0 : index
    %18 = vector.load %arg4[%c0_6, %c0_7] : memref<384x128xbf16, #tpu.memory_space<vmem>>, vector<384x128xbf16>
    %cst_8 = arith.constant dense<0.000000e+00> : vector<28x128xf32>
    %19 = tpu.matmul %17, %18, %cst_8 {dimension_numbers = #tpu.dot_dimension_numbers<[1], [0], [0], [1], [0, 0, 1, 1], [], []>} : vector<28x384xbf16>, vector<384x128xbf16>, vector<28x128xf32> -> vector<28x128xf32>
    %c0_9 = arith.constant 0 : index
    %c0_10 = arith.constant 0 : index
    %20 = vector.load %arg5[%c0_9, %c0_10] : memref<1x128xf32, #tpu.memory_space<vmem>>, vector<1x128xf32>
    %21 = vector.broadcast %20 : vector<1x128xf32> to vector<28x128xf32>
    %22 = arith.addf %19, %21 : vector<28x128xf32>
    %23 = vector.extract_strided_slice %22 {offsets = [0, 0], sizes = [12, 128], strides = [1, 1]} : vector<28x128xf32> to vector<12x128xf32>
    %c0_11 = arith.constant 0 : index
    %c0_12 = arith.constant 0 : index
    %c0_13 = arith.constant 0 : index
    %c0_14 = arith.constant 0 : index
    %24 = vector.load %arg6[%c0_11, %c0_12, %c0_13, %c0_14] : memref<1x2x12x128xf32, #tpu.memory_space<vmem>>, vector<1x1x12x128xf32>
    %25 = vector.shape_cast %24 : vector<1x1x12x128xf32> to vector<12x128xf32>
    %26 = vector.shape_cast %23 : vector<12x128xf32> to vector<1x1x12x128xf32>
    tpu.vector_store %arg6[%c0_11, %c0_12, %c0_13, %c0_14], %26 {strides = array<i32>} : memref<1x2x12x128xf32, #tpu.memory_space<vmem>>, vector<1x1x12x128xf32>,
    %27 = vector.extract_strided_slice %22 {offsets = [16, 0], sizes = [12, 128], strides = [1, 1]} : vector<28x128xf32> to vector<12x128xf32>
    %c0_15 = arith.constant 0 : index
    %c1 = arith.constant 1 : index
    %c0_16 = arith.constant 0 : index
    %c0_17 = arith.constant 0 : index
    %28 = vector.load %arg6[%c0_15, %c1, %c0_16, %c0_17] : memref<1x2x12x128xf32, #tpu.memory_space<vmem>>, vector<1x1x12x128xf32>
    %29 = vector.shape_cast %28 : vector<1x1x12x128xf32> to vector<12x128xf32>
    %30 = vector.shape_cast %27 : vector<12x128xf32> to vector<1x1x12x128xf32>
    tpu.vector_store %arg6[%c0_15, %c1, %c0_16, %c0_17], %30 {strides = array<i32>} : memref<1x2x12x128xf32, #tpu.memory_space<vmem>>, vector<1x1x12x128xf32>,
    return
  }
  func.func @transform_0(%arg0: i32) -> (i32, i32) {
    %c0_i32 = arith.constant 0 : i32
    %c0_i32_0 = arith.constant 0 : i32
    return %arg0, %c0_i32 : i32, i32
  }
  func.func @transform_1(%arg0: i32) -> (i32, i32) {
    %c0_i32 = arith.constant 0 : i32
    %c0_i32_0 = arith.constant 0 : i32
    %c0_i32_1 = arith.constant 0 : i32
    return %c0_i32, %c0_i32_0 : i32, i32
  }
  func.func @transform_2(%arg0: i32) -> (i32, i32) {
    %c0_i32 = arith.constant 0 : i32
    %c0_i32_0 = arith.constant 0 : i32
    %c0_i32_1 = arith.constant 0 : i32
    return %c0_i32, %c0_i32_0 : i32, i32
  }
  func.func @transform_3(%arg0: i32) -> (i32, i32) {
    %c0_i32 = arith.constant 0 : i32
    %c0_i32_0 = arith.constant 0 : i32
    %c0_i32_1 = arith.constant 0 : i32
    return %c0_i32, %c0_i32_0 : i32, i32
  }
  func.func @transform_4(%arg0: i32) -> (i32, i32) {
    %c0_i32 = arith.constant 0 : i32
    %c0_i32_0 = arith.constant 0 : i32
    %c0_i32_1 = arith.constant 0 : i32
    return %c0_i32, %c0_i32_0 : i32, i32
  }
  func.func @transform_5(%arg0: i32) -> (i32, i32, i32, i32) {
    %c0_i32 = arith.constant 0 : i32
    %c0_i32_0 = arith.constant 0 : i32
    %c0_i32_1 = arith.constant 0 : i32
    %c0_i32_2 = arith.constant 0 : i32
    return %arg0, %c0_i32, %c0_i32_0, %c0_i32_1 : i32, i32, i32, i32
  }
}

</mosaic_0001>

<llo_original>
// kernel: tpu_custom_call.1
$region0: #{tpu_custom_call.1}
  #allocation0 [shape = 'u32[]', space=smem, size = 0x4, offset = 0x4, fixed_abs, tag = 'smem constant byte address 0x4 - core index']
  #allocation1 [shape = 'u32[144,128]{1,0:T(1,128)}', space=vmem, size = 0x12000, scoped, tag = 'internal scratch']
  %s0 = inlined_call_operand.hbm [shape: f32[32,64], index: 0, kind: input, shape index: {}]
  %s1 = inlined_call_operand.hbm [shape: bf16[192,128], index: 1, kind: input, shape index: {}]
  %s2 = inlined_call_operand.vmem [shape: f32[1,128], index: 2, kind: input, shape index: {}]
  %s3 = inlined_call_operand.hbm [shape: bf16[384,128], index: 3, kind: input, shape index: {}]
  %s4 = inlined_call_operand.vmem [shape: f32[1,128], index: 4, kind: input, shape index: {}]
  %s5 = inlined_call_operand.vmem [shape: f32[1,2,12,128], index: 5, kind: output, shape index: {}]
  %s6 = sld [smem:[#allocation0]]
  $region42: #{tpu_custom_call.1} parent=0
    _
  %s8 = ssub.s32 1, %s6
  %s9 = scalar_select 0, %s8, %s6
  $region1: #{tpu_custom_call.1} parent=0
    #allocation2 [shape = 'u8[16384]{0}', space=vmem, size = 0x4000, scoped, tag = 'input window, operand 0, single buffered']
    #allocation3 [shape = 's32[1]{0}', space=sflag, size = 0x4, scoped, tag = 'scoped memory for tpu_custom_call.1']
    #allocation4 [shape = 'u8[49152]{0}', space=vmem, size = 0xc000, scoped, tag = 'input window, operand 1, single buffered']
    #allocation5 [shape = 's32[1]{0}', space=sflag, size = 0x4, scoped, tag = 'scoped memory for tpu_custom_call.1']
    #allocation6 [shape = 'u8[98304]{0}', space=vmem, size = 0x18000, scoped, tag = 'input window, operand 3, single buffered']
    %10 = vsyncpa [#allocation3], 0
    %11 = vsyncpa [#allocation5], 0
    // Predicated region
    $region2: #{tpu_custom_call.1} parent=1 // pred_check
      _
    $region3: #{tpu_custom_call.1} parent=1 // pred_check_branch
      %13 = sbr.rel (0) target = $region5
    $region4: #{tpu_custom_call.1} parent=1 // pred_region
      %s15 = ssub.s32 512, 512
      %16 = vsyncadd [#allocation3], %s15
      %s17 = sshll.u32 [#allocation2], 4
      %s18 = int_to_ptr.vmem [resolvable:$true] %s17
      %23 = dma.hbm_to_vmem [thread:$0]  %s0, 512, %s18, [#allocation3], 128, 128, 8
    $region5: #{tpu_custom_call.1} parent=1 // pred_fallthru
      _
    // Predicated region
    $region6: #{tpu_custom_call.1} parent=1 // pred_check
      _
    $region7: #{tpu_custom_call.1} parent=1 // pred_check_branch
      %25 = sbr.rel (0) target = $region9
    $region8: #{tpu_custom_call.1} parent=1 // pred_region
      %s27 = ssub.s32 1536, 1536
      %28 = vsyncadd [#allocation5], %s27
      %s29 = sshll.u32 [#allocation4], 4
      %s30 = int_to_ptr.vmem [resolvable:$true] %s29
      %35 = dma.hbm_to_vmem [thread:$0]  %s1, 1536, %s30, [#allocation5], 64, 64, 4
    $region9: #{tpu_custom_call.1} parent=1 // pred_fallthru
      _
    // Predicated region
    $region10: #{tpu_custom_call.1} parent=1 // pred_check
      _
    $region11: #{tpu_custom_call.1} parent=1 // pred_check_branch
      %37 = sbr.rel (0) target = $region13
    $region12: #{tpu_custom_call.1} parent=1 // pred_region
      _
    $region13: #{tpu_custom_call.1} parent=1 // pred_fallthru
      _
    // Predicated region
    $region14: #{tpu_custom_call.1} parent=1 // pred_check
      _
    $region15: #{tpu_custom_call.1} parent=1 // pred_check_branch
      %39 = sbr.rel (0) target = $region17
    $region16: #{tpu_custom_call.1} parent=1 // pred_region
      %s41 = ssub.s32 3072, 3072
      %42 = vsyncadd [#allocation5], %s41
      %s43 = sshll.u32 [#allocation6], 4
      %s44 = int_to_ptr.vmem [resolvable:$true] %s43
      %49 = dma.hbm_to_vmem [thread:$0]  %s3, 3072, %s44, [#allocation5], 64, 64, 4
    $region17: #{tpu_custom_call.1} parent=1 // pred_fallthru
      _
    // Predicated region
    $region18: #{tpu_custom_call.1} parent=1 // pred_check
      _
    $region19: #{tpu_custom_call.1} parent=1 // pred_check_branch
      %51 = sbr.rel (0) target = $region21
    $region20: #{tpu_custom_call.1} parent=1 // pred_region
      _
    $region21: #{tpu_custom_call.1} parent=1 // pred_fallthru
      _
    // Predicated region
    $region22: #{tpu_custom_call.1} parent=1 // pred_check
      _
    $region23: #{tpu_custom_call.1} parent=1 // pred_check_branch
      %53 = sbr.rel (0) target = $region25
    $region24: #{tpu_custom_call.1} parent=1 // pred_region
      %54 = dma.done [#allocation3], 512
    $region25: #{tpu_custom_call.1} parent=1 // pred_fallthru
      _
    // Predicated region
    $region26: #{tpu_custom_call.1} parent=1 // pred_check
      _
    $region27: #{tpu_custom_call.1} parent=1 // pred_check_branch
      %56 = sbr.rel (0) target = $region29
    $region28: #{tpu_custom_call.1} parent=1 // pred_region
      %57 = dma.done [#allocation5], 1536
    $region29: #{tpu_custom_call.1} parent=1 // pred_fallthru
      _
    // Predicated region
    $region30: #{tpu_custom_call.1} parent=1 // pred_check
      _
    $region31: #{tpu_custom_call.1} parent=1 // pred_check_branch
      %59 = sbr.rel (0) target = $region33
    $region32: #{tpu_custom_call.1} parent=1 // pred_region
      %60 = dma.done [#allocation5], 3072
    $region33: #{tpu_custom_call.1} parent=1 // pred_fallthru
      _
    %v62 = vld [vmem:[#allocation2] sm:$0xff]
    %v63 = vld [vmem:[#allocation2 + $0x8] sm:$0xff]
    %v64 = vld [vmem:[#allocation2 + $0x10] sm:$0xff]
    %v65 = vld [vmem:[#allocation2 + $0x18] sm:$0xff]
    %vm70 = vcmask 1046528
    %v71 = vrot.slane %v62, 1
    %v72 = vrot.slane %v63, 1
    %v73 = vsel %vm70, %v71, %v72
    %v74 = vrot.slane %v64, 1
    %v75 = vsel %vm70, %v72, %v74
    %v76 = vrot.slane %v65, 1
    %v77 = vsel %vm70, %v74, %v76
    %78 = vrot.lane.b32.xlu0 %v73, 64
    %v79 = vpop.permute.xlu0 %78
    %80 = vrot.lane.b32.xlu0 %v75, 64
    %v81 = vpop.permute.xlu0 %80
    %82 = vrot.lane.b32.xlu0 %v77, 64
    %v83 = vpop.permute.xlu0 %82
    %84 = vrot.lane.b32.xlu0 %v76, 64
    %v85 = vpop.permute.xlu0 %84
    %vm90 = vcmask 1045504
    %v91 = vrot.slane %v62, 2
    %v92 = vrot.slane %v63, 2
    %v93 = vsel %vm90, %v91, %v92
    %v94 = vrot.slane %v64, 2
    %v95 = vsel %vm90, %v92, %v94
    %v96 = vrot.slane %v65, 2
    %v97 = vsel %vm90, %v94, %v96
    %vm102 = vcmask 523264
    %v103 = vsel %vm102, %v62, %v79
    %v104 = vsel %vm102, %v63, %v81
    %v105 = vsel %vm102, %v64, %v83
    %v106 = vsel %vm102, %v65, %v85
    %v107 = vpack.c.bf16 %v104, %v103
    %v108 = vpack.c.bf16 %v95, %v93
    %v109 = vpack.c.bf16 %v106, %v105
    %v110 = vpack.c.bf16 %v96, %v97
    %v111 = vld [vmem:[#allocation4] sm:$0xf]
    %v112 = vld [vmem:[#allocation4 + $0x4] sm:$0xf]
    %v113 = vld [vmem:[#allocation4 + $0x8] sm:$0xf]
    %v114 = vld [vmem:[#allocation4 + $0xc] sm:$0xf]
    %v115 = vld [vmem:[#allocation4 + $0x10] sm:$0xf]
    %v116 = vld [vmem:[#allocation4 + $0x14] sm:$0xf]
    %v117 = vld [vmem:[#allocation4 + $0x18] sm:$0xf]
    %v118 = vld [vmem:[#allocation4 + $0x1c] sm:$0xf]
    %v119 = vld [vmem:[#allocation4 + $0x20] sm:$0xf]
    %v120 = vld [vmem:[#allocation4 + $0x24] sm:$0xf]
    %v121 = vld [vmem:[#allocation4 + $0x28] sm:$0xf]
    %v122 = vld [vmem:[#allocation4 + $0x2c] sm:$0xf]
    %v123 = vld [vmem:[#allocation4 + $0x30] sm:$0xf]
    %v124 = vld [vmem:[#allocation4 + $0x34] sm:$0xf]
    %v125 = vld [vmem:[#allocation4 + $0x38] sm:$0xf]
    %v126 = vld [vmem:[#allocation4 + $0x3c] sm:$0xf]
    %v127 = vld [vmem:[#allocation4 + $0x40] sm:$0xf]
    %v128 = vld [vmem:[#allocation4 + $0x44] sm:$0xf]
    %v129 = vld [vmem:[#allocation4 + $0x48] sm:$0xf]
    %v130 = vld [vmem:[#allocation4 + $0x4c] sm:$0xf]
    %v131 = vld [vmem:[#allocation4 + $0x50] sm:$0xf]
    %v132 = vld [vmem:[#allocation4 + $0x54] sm:$0xf]
    %v133 = vld [vmem:[#allocation4 + $0x58] sm:$0xf]
    %v134 = vld [vmem:[#allocation4 + $0x5c] sm:$0xf]
    %v135 = vld [vmem:[%s2] sm:$0x1]
    %v137 = vlaneseq
    %v138 = vshrl.u32 %v137, 7
    %v139 = vsub.s32 0, %v138
    %v140 = vrot.slane %v135, %v139
    %v166 = vunpack.c.l.b16 %v111
    %v167 = vunpack.c.l.b16 %v112
    %v168 = vunpack.c.l.b16 %v113
    %v169 = vunpack.c.l.b16 %v114
    %v170 = vunpack.c.l.b16 %v115
    %v171 = vunpack.c.l.b16 %v116
    %v172 = vunpack.c.l.b16 %v117
    %v173 = vunpack.c.l.b16 %v118
    %v174 = vunpack.c.l.b16 %v119
    %v175 = vunpack.c.l.b16 %v120
    %v176 = vunpack.c.l.b16 %v121
    %v177 = vunpack.c.l.b16 %v122
    %v178 = vunpack.c.l.b16 %v123
    %v179 = vunpack.c.l.b16 %v124
    %v180 = vunpack.c.l.b16 %v125
    %v181 = vunpack.c.l.b16 %v126
    %v182 = vunpack.c.l.b16 %v127
    %v183 = vunpack.c.l.b16 %v128
    %v184 = vunpack.c.l.b16 %v129
    %v185 = vunpack.c.l.b16 %v130
    %v186 = vunpack.c.l.b16 %v131
    %v187 = vunpack.c.l.b16 %v132
    %v188 = vunpack.c.l.b16 %v133
    %v189 = vunpack.c.l.b16 %v134
    %v190 = vpack.c.b16 %v167, %v166
    %v191 = vpack.c.b16 %v169, %v168
    %v192 = vpack.c.b16 %v171, %v170
    %v193 = vpack.c.b16 %v173, %v172
    %v194 = vpack.c.b16 %v175, %v174
    %v195 = vpack.c.b16 %v177, %v176
    %v196 = vpack.c.b16 %v179, %v178
    %v197 = vpack.c.b16 %v181, %v180
    %v198 = vpack.c.b16 %v183, %v182
    %v199 = vpack.c.b16 %v185, %v184
    %v200 = vpack.c.b16 %v187, %v186
    %v201 = vpack.c.b16 %v189, %v188
    %v215 = vsel %vm102, %v108, 0
    %v218 = vsel %vm102, %v110, 0
    %220 = vmatprep.subr.bf16.mxu0 0
    %221 = vmatpush1.bf16.msra.mxu0 %v190
    %222 = vmatprep.subr.bf16.mxu0 0
    %223 = vmatpush1.bf16.msra.mxu0 %v191
    %224 = vmatprep.subr.bf16.mxu0 0
    %225 = vmatpush1.bf16.msra.mxu0 %v192
    %226 = vmatprep.subr.bf16.mxu0 0
    %227 = vmatpush1.bf16.msra.mxu0 %v193
    %228 = vmatprep.subr.bf16.mxu0 0
    %229 = vmatpush1.bf16.msra.mxu0 %v194
    %230 = vmatprep.subr.bf16.mxu0 0
    %231 = vmatpush1.bf16.msra.mxu0 %v195
    %232 = vmatprep.subr.bf16.mxu0 0
    %233 = vmatpush1.bf16.msra.mxu0 %v196
    %234 = vmatprep.subr.bf16.mxu0 0
    %235 = vmatpush1.bf16.msra.mxu0 %v197
    %236 = vmatprep.subr.bf16.mxu0 0
    %237 = vmatpush1.bf16.msra.mxu0 %v198
    %238 = vmatprep.subr.bf16.mxu0 0
    %239 = vmatpush1.bf16.msra.mxu0 %v199
    %240 = vmatprep.subr.bf16.mxu0 0
    %241 = vmatpush1.bf16.msra.mxu0 %v200
    %242 = vmatprep.subr.bf16.mxu0 0
    %243 = vmatpush1.bf16.msra.mxu0 %v201
    %244 = vmatprep.subr.bf16.mxu0 0
    %245 = vmatpush1.bf16.msra.mxu0 0
    %246 = vmatprep.subr.bf16.mxu0 0
    %247 = vmatpush1.bf16.msra.mxu0 0
    %248 = vmatprep.subr.bf16.mxu0 0
    %249 = vmatpush1.bf16.msra.mxu0 0
    %250 = vmatprep.subr.bf16.mxu0 0
    %251 = vmatpush1.bf16.msra.mxu0 0
    %252 = vmatprep.mubr.bf16.mxu0 %v215
    %253 = vmatmul.mubr.bf16.gmra.mrb[0].mxu0 %v107
    %v254 = vpop.f32.mrb[0].mxu0
    %v255 = vadd.f32 %v140, %v254
    %v256 = vpop.f32.mrb[0].mxu0
    %v257 = vpop.f32.mrb[0].mxu0
    %v258 = vadd.f32 %v140, %v257
    %v259 = vpop.f32.mrb[0].mxu0
    %260 = vmatprep.mubr.bf16.mxu0 %v218
    %261 = vmatmul.mubr.bf16.gmra.mrb[0].mxu0 %v109
    %v262 = vpop.f32.mrb[0].mxu0
    %v263 = vadd.f32 %v140, %v262
    %v264 = vpop.f32.mrb[0].mxu0
    %v265 = vpop.f32.mrb[0].mxu0
    %v266 = vadd.f32 %v140, %v265
    %v267 = vpop.f32.mrb[0].mxu0
    %268 = vdwg.mxu0
    %v269 = vmax.f32 %v255, 0.0
    %v270 = vmax.f32 %v258, 0.0
    %v271 = vmax.f32 %v263, 0.0
    %v272 = vmax.f32 %v266, 0.0
    %v277 = vrot.slane %v269, 1
    %v278 = vrot.slane %v270, 1
    %v279 = vsel %vm70, %v277, %v278
    %v280 = vrot.slane %v271, 1
    %v281 = vsel %vm70, %v278, %v280
    %v282 = vrot.slane %v272, 1
    %v283 = vsel %vm70, %v280, %v282
    %v288 = vrot.slane %v269, 2
    %v289 = vrot.slane %v270, 2
    %v290 = vsel %vm90, %v288, %v289
    %v291 = vrot.slane %v271, 2
    %v292 = vsel %vm90, %v289, %v291
    %v293 = vrot.slane %v272, 2
    %v294 = vsel %vm90, %v291, %v293
    %v299 = vpack.c.bf16 %v270, %v269
    %v300 = vpack.c.bf16 %v281, %v279
    %v301 = vpack.c.bf16 %v292, %v290
    %v302 = vpack.c.bf16 %v272, %v271
    %v303 = vpack.c.bf16 %v282, %v283
    %v304 = vpack.c.bf16 %v293, %v294
    %v305 = vld [vmem:[#allocation6] sm:$0xf]
    %v306 = vld [vmem:[#allocation6 + $0x4] sm:$0xf]
    %v307 = vld [vmem:[#allocation6 + $0x8] sm:$0xf]
    %v308 = vld [vmem:[#allocation6 + $0xc] sm:$0xf]
    %v309 = vld [vmem:[#allocation6 + $0x10] sm:$0xf]
    %v310 = vld [vmem:[#allocation6 + $0x14] sm:$0xf]
    %v311 = vld [vmem:[#allocation6 + $0x18] sm:$0xf]
    %v312 = vld [vmem:[#allocation6 + $0x1c] sm:$0xf]
    %v313 = vld [vmem:[#allocation6 + $0x20] sm:$0xf]
    %v314 = vld [vmem:[#allocation6 + $0x24] sm:$0xf]
    %v315 = vld [vmem:[#allocation6 + $0x28] sm:$0xf]
    %v316 = vld [vmem:[#allocation6 + $0x2c] sm:$0xf]
    %v317 = vld [vmem:[#allocation6 + $0x30] sm:$0xf]
    %v318 = vld [vmem:[#allocation6 + $0x34] sm:$0xf]
    %v319 = vld [vmem:[#allocation6 + $0x38] sm:$0xf]
    %v320 = vld [vmem:[#allocation6 + $0x3c] sm:$0xf]
    %v321 = vld [vmem:[#allocation6 + $0x40] sm:$0xf]
    %v322 = vld [vmem:[#allocation6 + $0x44] sm:$0xf]
    %v323 = vld [vmem:[#allocation6 + $0x48] sm:$0xf]
    %v324 = vld [vmem:[#allocation6 + $0x4c] sm:$0xf]
    %v325 = vld [vmem:[#allocation6 + $0x50] sm:$0xf]
    %v326 = vld [vmem:[#allocation6 + $0x54] sm:$0xf]
    %v327 = vld [vmem:[#allocation6 + $0x58] sm:$0xf]
    %v328 = vld [vmem:[#allocation6 + $0x5c] sm:$0xf]
    %v329 = vld [vmem:[#allocation6 + $0x60] sm:$0xf]
    %v330 = vld [vmem:[#allocation6 + $0x64] sm:$0xf]
    %v331 = vld [vmem:[#allocation6 + $0x68] sm:$0xf]
    %v332 = vld [vmem:[#allocation6 + $0x6c] sm:$0xf]
    %v333 = vld [vmem:[#allocation6 + $0x70] sm:$0xf]
    %v334 = vld [vmem:[#allocation6 + $0x74] sm:$0xf]
    %v335 = vld [vmem:[#allocation6 + $0x78] sm:$0xf]
    %v336 = vld [vmem:[#allocation6 + $0x7c] sm:$0xf]
    %v337 = vld [vmem:[#allocation6 + $0x80] sm:$0xf]
    %v338 = vld [vmem:[#allocation6 + $0x84] sm:$0xf]
    %v339 = vld [vmem:[#allocation6 + $0x88] sm:$0xf]
    %v340 = vld [vmem:[#allocation6 + $0x8c] sm:$0xf]
    %v341 = vld [vmem:[#allocation6 + $0x90] sm:$0xf]
    %v342 = vld [vmem:[#allocation6 + $0x94] sm:$0xf]
    %v343 = vld [vmem:[#allocation6 + $0x98] sm:$0xf]
    %v344 = vld [vmem:[#allocation6 + $0x9c] sm:$0xf]
    %v345 = vld [vmem:[#allocation6 + $0xa0] sm:$0xf]
    %v346 = vld [vmem:[#allocation6 + $0xa4] sm:$0xf]
    %v347 = vld [vmem:[#allocation6 + $0xa8] sm:$0xf]
    %v348 = vld [vmem:[#allocation6 + $0xac] sm:$0xf]
    %v349 = vld [vmem:[#allocation6 + $0xb0] sm:$0xf]
    %v350 = vld [vmem:[#allocation6 + $0xb4] sm:$0xf]
    %v351 = vld [vmem:[#allocation6 + $0xb8] sm:$0xf]
    %v352 = vld [vmem:[#allocation6 + $0xbc] sm:$0xf]
    %v353 = vld [vmem:[%s4] sm:$0x1]
    %v355 = vlaneseq
    %v356 = vshrl.u32 %v355, 7
    %v357 = vsub.s32 0, %v356
    %v358 = vrot.slane %v353, %v357
    %v408 = vunpack.c.l.b16 %v305
    %v409 = vunpack.c.l.b16 %v306
    %v410 = vunpack.c.l.b16 %v307
    %v411 = vunpack.c.l.b16 %v308
    %v412 = vunpack.c.l.b16 %v309
    %v413 = vunpack.c.l.b16 %v310
    %v414 = vunpack.c.l.b16 %v311
    %v415 = vunpack.c.l.b16 %v312
    %v416 = vunpack.c.l.b16 %v313
    %v417 = vunpack.c.l.b16 %v314
    %v418 = vunpack.c.l.b16 %v315
    %v419 = vunpack.c.l.b16 %v316
    %v420 = vunpack.c.l.b16 %v317
    %v421 = vunpack.c.l.b16 %v318
    %v422 = vunpack.c.l.b16 %v319
    %v423 = vunpack.c.l.b16 %v320
    %v424 = vunpack.c.l.b16 %v321
    %v425 = vunpack.c.l.b16 %v322
    %v426 = vunpack.c.l.b16 %v323
    %v427 = vunpack.c.l.b16 %v324
    %v428 = vunpack.c.l.b16 %v325
    %v429 = vunpack.c.l.b16 %v326
    %v430 = vunpack.c.l.b16 %v327
    %v431 = vunpack.c.l.b16 %v328
    %v432 = vunpack.c.l.b16 %v329
    %v433 = vunpack.c.l.b16 %v330
    %v434 = vunpack.c.l.b16 %v331
    %v435 = vunpack.c.l.b16 %v332
    %v436 = vunpack.c.l.b16 %v333
    %v437 = vunpack.c.l.b16 %v334
    %v438 = vunpack.c.l.b16 %v335
    %v439 = vunpack.c.l.b16 %v336
    %v440 = vunpack.c.l.b16 %v337
    %v441 = vunpack.c.l.b16 %v338
    %v442 = vunpack.c.l.b16 %v339
    %v443 = vunpack.c.l.b16 %v340
    %v444 = vunpack.c.l.b16 %v341
    %v445 = vunpack.c.l.b16 %v342
    %v446 = vunpack.c.l.b16 %v343
    %v447 = vunpack.c.l.b16 %v344
    %v448 = vunpack.c.l.b16 %v345
    %v449 = vunpack.c.l.b16 %v346
    %v450 = vunpack.c.l.b16 %v347
    %v451 = vunpack.c.l.b16 %v348
    %v452 = vunpack.c.l.b16 %v349
    %v453 = vunpack.c.l.b16 %v350
    %v454 = vunpack.c.l.b16 %v351
    %v455 = vunpack.c.l.b16 %v352
    %v456 = vpack.c.b16 %v409, %v408
    %v457 = vpack.c.b16 %v411, %v410
    %v458 = vpack.c.b16 %v413, %v412
    %v459 = vpack.c.b16 %v415, %v414
    %v460 = vpack.c.b16 %v417, %v416
    %v461 = vpack.c.b16 %v419, %v418
    %v462 = vpack.c.b16 %v421, %v420
    %v463 = vpack.c.b16 %v423, %v422
    %v464 = vpack.c.b16 %v425, %v424
    %v465 = vpack.c.b16 %v427, %v426
    %v466 = vpack.c.b16 %v429, %v428
    %v467 = vpack.c.b16 %v431, %v430
    %v468 = vpack.c.b16 %v433, %v432
    %v469 = vpack.c.b16 %v435, %v434
    %v470 = vpack.c.b16 %v437, %v436
    %v471 = vpack.c.b16 %v439, %v438
    %v472 = vpack.c.b16 %v441, %v440
    %v473 = vpack.c.b16 %v443, %v442
    %v474 = vpack.c.b16 %v445, %v444
    %v475 = vpack.c.b16 %v447, %v446
    %v476 = vpack.c.b16 %v449, %v448
    %v477 = vpack.c.b16 %v451, %v450
    %v478 = vpack.c.b16 %v453, %v452
    %v479 = vpack.c.b16 %v455, %v454
    %504 = vmatprep.subr.bf16.mxu0 0
    %505 = vmatpush1.bf16.msra.mxu0 %v456
    %506 = vmatprep.subr.bf16.mxu0 0
    %507 = vmatpush1.bf16.msra.mxu0 %v457
    %508 = vmatprep.subr.bf16.mxu0 0
    %509 = vmatpush1.bf16.msra.mxu0 %v458
    %510 = vmatprep.subr.bf16.mxu0 0
    %511 = vmatpush1.bf16.msra.mxu0 %v459
    %512 = vmatprep.subr.bf16.mxu0 0
    %513 = vmatpush1.bf16.msra.mxu0 %v460
    %514 = vmatprep.subr.bf16.mxu0 0
    %515 = vmatpush1.bf16.msra.mxu0 %v461
    %516 = vmatprep.subr.bf16.mxu0 0
    %517 = vmatpush1.bf16.msra.mxu0 %v462
    %518 = vmatprep.subr.bf16.mxu0 0
    %519 = vmatpush1.bf16.msra.mxu0 %v463
    %520 = vmatprep.subr.bf16.mxu0 0
    %521 = vmatpush1.bf16.msra.mxu0 %v464
    %522 = vmatprep.subr.bf16.mxu0 0
    %523 = vmatpush1.bf16.msra.mxu0 %v465
    %524 = vmatprep.subr.bf16.mxu0 0
    %525 = vmatpush1.bf16.msra.mxu0 %v466
    %526 = vmatprep.subr.bf16.mxu0 0
    %527 = vmatpush1.bf16.msra.mxu0 %v467
    %528 = vmatprep.subr.bf16.mxu0 0
    %529 = vmatpush1.bf16.msra.mxu0 %v468
    %530 = vmatprep.subr.bf16.mxu0 0
    %531 = vmatpush1.bf16.msra.mxu0 %v469
    %532 = vmatprep.subr.bf16.mxu0 0
    %533 = vmatpush1.bf16.msra.mxu0 %v470
    %534 = vmatprep.subr.bf16.mxu0 0
    %535 = vmatpush1.bf16.msra.mxu0 %v471
    %536 = vmatprep.mubr.bf16.mxu0 %v300
    %537 = vmatmul.mubr.bf16.gmra.mrb[0].mxu0 %v299
    %v538 = vpop.f32.mrb[0].mxu0
    %v539 = vadd.f32 %v358, %v538
    %v540 = vpop.f32.mrb[0].mxu0
    %v541 = vpop.f32.mrb[0].mxu0
    %v542 = vadd.f32 %v358, %v541
    %v543 = vpop.f32.mrb[0].mxu0
    %544 = vmatprep.mubr.bf16.mxu0 %v303
    %545 = vmatmul.mubr.bf16.gmra.mrb[0].mxu0 %v302
    %v546 = vpop.f32.mrb[0].mxu0
    %v547 = vadd.f32 %v358, %v546
    %v548 = vpop.f32.mrb[0].mxu0
    %v549 = vpop.f32.mrb[0].mxu0
    %v550 = vadd.f32 %v358, %v549
    %v551 = vpop.f32.mrb[0].mxu0
    %552 = vdwg.mxu0
    %553 = vmatprep.subr.bf16.mxu0 0
    %554 = vmatpush1.bf16.msra.mxu0 %v472
    %555 = vmatprep.subr.bf16.mxu0 0
    %556 = vmatpush1.bf16.msra.mxu0 %v473
    %557 = vmatprep.subr.bf16.mxu0 0
    %558 = vmatpush1.bf16.msra.mxu0 %v474
    %559 = vmatprep.subr.bf16.mxu0 0
    %560 = vmatpush1.bf16.msra.mxu0 %v475
    %561 = vmatprep.subr.bf16.mxu0 0
    %562 = vmatpush1.bf16.msra.mxu0 %v476
    %563 = vmatprep.subr.bf16.mxu0 0
    %564 = vmatpush1.bf16.msra.mxu0 %v477
    %565 = vmatprep.subr.bf16.mxu0 0
    %566 = vmatpush1.bf16.msra.mxu0 %v478
    %567 = vmatprep.subr.bf16.mxu0 0
    %568 = vmatpush1.bf16.msra.mxu0 %v479
    %569 = vmatprep.subr.bf16.mxu0 0
    %570 = vmatpush1.bf16.msra.mxu0 0
    %571 = vmatprep.subr.bf16.mxu0 0
    %572 = vmatpush1.bf16.msra.mxu0 0
    %573 = vmatprep.subr.bf16.mxu0 0
    %574 = vmatpush1.bf16.msra.mxu0 0
    %575 = vmatprep.subr.bf16.mxu0 0
    %576 = vmatpush1.bf16.msra.mxu0 0
    %577 = vmatprep.subr.bf16.mxu0 0
    %578 = vmatpush1.bf16.msra.mxu0 0
    %579 = vmatprep.subr.bf16.mxu0 0
    %580 = vmatpush1.bf16.msra.mxu0 0
    %581 = vmatprep.subr.bf16.mxu0 0
    %582 = vmatpush1.bf16.msra.mxu0 0
    %583 = vmatprep.subr.bf16.mxu0 0
    %584 = vmatpush1.bf16.msra.mxu0 0
    %585 = vmatprep.mubr.bf16.mxu0 0
    %586 = vmatmul.mubr.bf16.gmra.mrb[0].mxu0 %v301
    %v587 = vpop.f32.mrb[0].mxu0
    %v588 = vadd.f32 %v539, %v587
    %v589 = vpop.f32.mrb[0].mxu0
    %v590 = vpop.f32.mrb[0].mxu0
    %v591 = vadd.f32 %v542, %v590
    %v592 = vpop.f32.mrb[0].mxu0
    %593 = vmatprep.mubr.bf16.mxu0 0
    %594 = vmatmul.mubr.bf16.gmra.mrb[0].mxu0 %v304
    %v595 = vpop.f32.mrb[0].mxu0
    %v596 = vadd.f32 %v547, %v595
    %v597 = vpop.f32.mrb[0].mxu0
    %v598 = vpop.f32.mrb[0].mxu0
    %v599 = vadd.f32 %v550, %v598
    %v600 = vpop.f32.mrb[0].mxu0
    %601 = vdwg.mxu0
    %602 = vst [vmem:[%s5] sm:$0xff] %v588
    %603 = vst [vmem:[%s5 + $0x8] sm:$0xf] %v591
    %s604 = scalar_lea.vmem %s5, 16
    %605 = vst [vmem:[%s604] sm:$0xff] %v596
    %606 = vst [vmem:[%s604 + $0x8] sm:$0xf] %v599
    // Predicated region
    $region34: #{tpu_custom_call.1} parent=1 // pred_check
      _
    $region35: #{tpu_custom_call.1} parent=1 // pred_check_branch
      %608 = sbr.rel (0) target = $region37
    $region36: #{tpu_custom_call.1} parent=1 // pred_region
      _
    $region37: #{tpu_custom_call.1} parent=1 // pred_fallthru
      _
    // Predicated region
    $region38: #{tpu_custom_call.1} parent=1 // pred_check
      _
    $region39: #{tpu_custom_call.1} parent=1 // pred_check_branch
      %610 = sbr.rel (0) target = $region41
    $region40: #{tpu_custom_call.1} parent=1 // pred_region
      _
    $region41: #{tpu_custom_call.1} parent=1 // pred_fallthru
      _
    %611 = vsyncpa [#allocation3], 1
    %612 = vsyncpa [#allocation5], 1

</llo_original>
